<compile_context>
chip_gen: v7x
topology: tpu7x:2x2x1
jax: 0.10.0
libtpu: 0.0.40
codegen_flags: <defaults>
</compile_context>

<pallas_src>
import functools

import jax
import jax.numpy as jnp
from jax.experimental import pallas as pl
from jax.experimental.pallas import tpu as pltpu

# ------------------------- model configuration (small) -------------------------
BATCH = 2
CHANNELS = 1
IMAGE_SIZES = (16, 16, 16)
INIT_PATCH = (4, 4, 4)
PATCH_SIZES = (2, 2, 2)
EMBED_DIM = 32
LAYER_HEADS = (2, 2)
DEPTHS = (1, 1)
DIM_HEAD = 16
MLP_MULT = 2
NUM_CLASSES = 4
EPS = 1e-5

ACT_DTYPE = jnp.bfloat16          # activation dtype between kernels (halves DMA bytes)


# ------------------------------ Pallas kernels ---------------------------------
def _fused_mm_kernel(*refs, pre_norm, post_norm, act, eps):
    """(optional row-norm) -> matmul -> +bias -> (optional GELU) -> (optional row-norm)."""
    it = iter(refs)
    a_ref = next(it)
    w_ref = next(it)
    bias_ref = next(it)
    if pre_norm:
        pg_ref = next(it)
        pb_ref = next(it)
    if post_norm:
        qg_ref = next(it)
        qb_ref = next(it)
    o_ref = next(it)

    a = a_ref[...].astype(jnp.float32)
    if pre_norm:
        # ChanNorm semantics: (x - mean) / (sqrt(biased var) + eps) * g + b
        mu = jnp.mean(a, axis=-1, keepdims=True)
        var = jnp.mean((a - mu) ** 2, axis=-1, keepdims=True)
        a = (a - mu) / (jnp.sqrt(var) + eps)
        a = a * pg_ref[...].astype(jnp.float32) + pb_ref[...].astype(jnp.float32)

    # bf16 MXU operands, fp32 accumulation.
    y = jnp.dot(a.astype(jnp.bfloat16), w_ref[...].astype(jnp.bfloat16),
                preferred_element_type=jnp.float32)
    y = y + bias_ref[...].astype(jnp.float32)

    if act == "gelu":
        # TODO(synk): Transformer body not given in the reference; tanh-approx GELU used.
        y = jax.nn.gelu(y, approximate=True)

    if post_norm:
        mu = jnp.mean(y, axis=-1, keepdims=True)
        var = jnp.mean((y - mu) ** 2, axis=-1, keepdims=True)
        y = (y - mu) / (jnp.sqrt(var) + eps)
        y = y * qg_ref[...].astype(jnp.float32) + qb_ref[...].astype(jnp.float32)

    o_ref[...] = y.astype(o_ref.dtype)


def fused_matmul(a, w, bias, *, pre_norm=None, post_norm=None, act=None,
                 out_dtype=ACT_DTYPE, eps=EPS, row_tile=64):
    """a:(M,K) @ w:(K,N) + bias with optional fused norms / activation.

    K and N are blocked at their full extent (no padding). M is tiled into
    `row_tile`-row parallel blocks when it divides evenly (engages the 2nd
    TensorCore on v7x); otherwise a single full-M block is used.
    """
    M, K = a.shape
    K2, N = w.shape
    assert K == K2
    mt = row_tile if (M > row_tile and M % row_tile == 0 and row_tile % 16 == 0) else M
    grid = (M // mt,)

    inputs = [a, w, bias.reshape(1, N)]
    in_specs = [
        pl.BlockSpec((mt, K), lambda i: (i, 0)),
        pl.BlockSpec((K, N), lambda i: (0, 0)),
        pl.BlockSpec((1, N), lambda i: (0, 0)),
    ]
    if pre_norm is not None:
        g, b = pre_norm
        inputs += [g.reshape(1, K), b.reshape(1, K)]
        in_specs += [pl.BlockSpec((1, K), lambda i: (0, 0)),
                     pl.BlockSpec((1, K), lambda i: (0, 0))]
    if post_norm is not None:
        g, b = post_norm
        inputs += [g.reshape(1, N), b.reshape(1, N)]
        in_specs += [pl.BlockSpec((1, N), lambda i: (0, 0)),
                     pl.BlockSpec((1, N), lambda i: (0, 0))]

    return pl.pallas_call(
        functools.partial(_fused_mm_kernel,
                          pre_norm=pre_norm is not None,
                          post_norm=post_norm is not None,
                          act=act, eps=eps),
        out_shape=jax.ShapeDtypeStruct((M, N), out_dtype),
        grid=grid,
        in_specs=in_specs,
        out_specs=pl.BlockSpec((mt, N), lambda i: (i, 0)),
        compiler_params=pltpu.CompilerParams(dimension_semantics=("parallel",)),
    )(*inputs)


def _rownorm_kernel(x_ref, g_ref, b_ref, o_ref, *, eps):
    x = x_ref[...].astype(jnp.float32)
    mu = jnp.mean(x, axis=-1, keepdims=True)
    var = jnp.mean((x - mu) ** 2, axis=-1, keepdims=True)   # biased (unbiased=False)
    y = (x - mu) / (jnp.sqrt(var) + eps)                    # ChanNorm: eps added to std
    o_ref[...] = (y * g_ref[...] + b_ref[...]).astype(o_ref.dtype)


def pallas_rownorm(x2d, g, b, eps=EPS, out_dtype=jnp.float32):
    """Standalone ChanNorm over the last dim of a small (R, C) slab (head path)."""
    R, C = x2d.shape
    return pl.pallas_call(
        functools.partial(_rownorm_kernel, eps=eps),
        out_shape=jax.ShapeDtypeStruct((R, C), out_dtype),
        grid=(1,),
        in_specs=[pl.BlockSpec((R, C), lambda i: (0, 0)),
                  pl.BlockSpec((1, C), lambda i: (0, 0)),
                  pl.BlockSpec((1, C), lambda i: (0, 0))],
        out_specs=pl.BlockSpec((R, C), lambda i: (0, 0)),
    )(x2d, g.reshape(1, C).astype(jnp.float32), b.reshape(1, C).astype(jnp.float32))


def _attn_kernel(qkv_ref, o_ref, *, heads, dim_head, scale):
    """Per-block MHA on a (bbt, S, 3*H*Dh) slab; output heads merged -> (bbt, S, H*Dh)."""
    qkv = qkv_ref[...].astype(jnp.float32)
    inner = heads * dim_head
    outs = []
    for h in range(heads):                       # static unroll (heads == 2)
        q = qkv[:, :, h * dim_head:(h + 1) * dim_head]
        k = qkv[:, :, inner + h * dim_head:inner + (h + 1) * dim_head]
        v = qkv[:, :, 2 * inner + h * dim_head:2 * inner + (h + 1) * dim_head]
        s = jnp.einsum('bqd,bkd->bqk', q, k,
                       preferred_element_type=jnp.float32) * scale
        s = s - jnp.max(s, axis=-1, keepdims=True)
        p = jnp.exp(s)
        p = p / jnp.sum(p, axis=-1, keepdims=True)
        outs.append(jnp.einsum('bqk,bkd->bqd', p, v,
                               preferred_element_type=jnp.float32))
    o_ref[...] = jnp.concatenate(outs, axis=-1).astype(o_ref.dtype)


def pallas_attention(qkv, heads, dim_head):
    """qkv: (BB, S, 3*H*Dh) -> attention output (BB, S, H*Dh), lane-dense store.

    All spatial blocks are processed in at most 2 grid steps (parallel for v7x).
    """
    BB, S, F = qkv.shape
    inner = heads * dim_head
    assert F == 3 * inner
    scale = dim_head ** -0.5
    bbt = BB // 2 if (BB % 2 == 0 and BB >= 2) else BB
    grid = (BB // bbt,)
    return pl.pallas_call(
        functools.partial(_attn_kernel, heads=heads, dim_head=dim_head, scale=scale),
        out_shape=jax.ShapeDtypeStruct((BB, S, inner), ACT_DTYPE),
        grid=grid,
        in_specs=[pl.BlockSpec((bbt, S, F), lambda i: (i, 0, 0))],
        out_specs=pl.BlockSpec((bbt, S, inner), lambda i: (i, 0, 0)),
        compiler_params=pltpu.CompilerParams(dimension_semantics=("parallel",)),
    )(qkv)


# ------------------------------ model pieces (glue + kernels) ------------------
def block_fn(x, p):
    p1, p2, p3 = p
    b, n, h, w, d = x.shape
    gh, gw, gd = h // p1, w // p2, d // p3
    x = x.reshape(b, n, gh, p1, gw, p2, gd, p3)
    x = jnp.transpose(x, (0, 2, 4, 6, 3, 5, 7, 1)).reshape(b, gh * gw * gd, p1 * p2 * p3, n)
    return x, (gh, gw, gd)


def unblock_fn(x, p, gs):
    p1, p2, p3 = p
    gh, gw, gd = gs
    b = x.shape[0]
    n = x.shape[-1]
    x = x.reshape(b, gh, gw, gd, p1, p2, p3, n)
    x = jnp.transpose(x, (0, 7, 1, 4, 2, 5, 3, 6)).reshape(b, n, gh * p1, gw * p2, gd * p3)
    return x


def patch_embed(x, w, bias):
    """Conv3d(kernel=stride=INIT_PATCH) as patch-extract + fused Pallas matmul+bias."""
    B, C, X, Y, Z = x.shape
    a, b2, c = INIT_PATCH
    gx, gy, gz = X // a, Y // b2, Z // c
    xr = x.reshape(B, C, gx, a, gy, b2, gz, c)
    xr = jnp.transpose(xr, (0, 2, 4, 6, 1, 3, 5, 7)).reshape(B * gx * gy * gz, C * a * b2 * c)
    wf = w.reshape(EMBED_DIM, -1).T                           # K order = (C, a, b, c)
    y = fused_matmul(xr, wf, bias)                            # (B*gx*gy*gz, E) bf16
    return jnp.transpose(y.reshape(B, gx, gy, gz, EMBED_DIM), (0, 4, 1, 2, 3))


def conv_norm_max(x, p):
    """Conv3d(3, padding=1) via channels-last im2col + fused matmul+bias+ChanNorm,
    then MaxPool3d(3, stride=2, padding=1)."""
    B, C, D, H, W = x.shape
    O = p['conv_w'].shape[0]
    xl = jnp.transpose(x, (0, 2, 3, 4, 1))                    # (B, D, H, W, C)
    xp = jnp.pad(xl, ((0, 0), (1, 1), (1, 1), (1, 1), (0, 0)))
    cols = jnp.concatenate(
        [xp[:, kd:kd + D, kh:kh + H, kw:kw + W, :]
         for kd in range(3) for kh in range(3) for kw in range(3)], axis=-1)
    cols = cols.reshape(B * D * H * W, 27 * C)                # K order = (kd, kh, kw, C)
    wf = jnp.transpose(p['conv_w'], (2, 3, 4, 1, 0)).reshape(27 * C, O)
    y = fused_matmul(cols, wf, p['conv_b'],
                     post_norm=(p['cn_g'], p['cn_b']))        # conv + bias + ChanNorm fused
    y = jnp.transpose(y.reshape(B, D, H, W, O), (0, 4, 1, 2, 3))
    # TODO(synk): MaxPool3d kept as lax.reduce_window glue (tiny reduction).
    y = jax.lax.reduce_window(
        y, jnp.array(-jnp.inf, dtype=y.dtype), jax.lax.max,
        (1, 1, 3, 3, 3), (1, 1, 2, 2, 2),
        [(0, 0), (0, 0), (1, 1), (1, 1), (1, 1)])
    return y


# TODO(synk): Transformer class body is not given in the reference source; implementing
# a standard pre-norm MHA + GELU-MLP transformer with a learned positional embedding.
# Note: the reference aliases LayerNorm = ChanNorm, so ChanNorm semantics are used
# for ln1/ln2 as well (eps added to std, biased variance).
def transformer(x, tp):
    B, G, S, Dm = x.shape
    BB = B * G
    x = x + tp['pos_emb'][None, None].astype(x.dtype)
    for layer in tp['layers']:
        H, Dh = layer['heads'], layer['dim_head']
        inner = H * Dh
        # --- attention block: fused (ln1 + QKV + bias), batched MHA, (out proj + bias) ---
        qkv = fused_matmul(x.reshape(-1, Dm), layer['w_qkv'], layer['b_qkv'],
                           pre_norm=(layer['ln1_g'], layer['ln1_b']))
        o = pallas_attention(qkv.reshape(BB, S, 3 * inner), H, Dh)     # (BB, S, inner)
        attn_out = fused_matmul(o.reshape(-1, inner), layer['w_o'], layer['b_o'])
        x = x + attn_out.reshape(B, G, S, Dm)
        # --- feed-forward block: fused (ln2 + FF1 + bias + GELU), (FF2 + bias) ---
        h1 = fused_matmul(x.reshape(-1, Dm), layer['w_ff1'], layer['b_ff1'],
                          pre_norm=(layer['ln2_g'], layer['ln2_b']), act="gelu")
        ff = fused_matmul(h1, layer['w_ff2'], layer['b_ff2'])
        x = x + ff.reshape(B, G, S, Dm)
    return x


def nest2_forward(params, x, x2):
    x = patch_embed(x, params['pe_w'], params['pe_b'])
    x, gs = block_fn(x, PATCH_SIZES)
    num_hier = len(DEPTHS)
    for level in range(num_hier):
        lvl = params['levels'][level]
        x = transformer(x, lvl['transformer'])
        x = unblock_fn(x, PATCH_SIZES, gs)
        if level != num_hier - 1:
            x = conv_norm_max(x, lvl['conv'])
            x, gs = block_fn(x, PATCH_SIZES)
    # mlp_head: ChanNorm + global mean over spatial dims
    B, C = x.shape[0], x.shape[1]
    xl = jnp.transpose(x, (0, 2, 3, 4, 1)).reshape(-1, C)
    xn = pallas_rownorm(xl, params['head_g'], params['head_b'])        # (B*spatial, C) f32
    xn = jnp.mean(xn.reshape(B, -1, C), axis=1)                        # (B, C)
    feat = jnp.concatenate([xn, x2.astype(jnp.float32)], axis=1)       # (B, C+2)
    logits = fused_matmul(feat, params['head2_w'], params['head2_b'],
                          out_dtype=jnp.float32)
    return logits


# ------------------------------ deterministic params ---------------------------
def init_params(key):
    ks = jax.random.split(key, 128)
    it = iter(ks)

    def nrm(shape, scale=0.02):
        return (scale * jax.random.normal(next(it), shape)).astype(jnp.float32)

    params = {
        'pe_w': nrm((EMBED_DIM, CHANNELS) + INIT_PATCH),
        'pe_b': jnp.zeros((EMBED_DIM,), jnp.float32),
        'head_g': jnp.ones((EMBED_DIM,), jnp.float32),
        'head_b': jnp.zeros((EMBED_DIM,), jnp.float32),
        'head2_w': nrm((EMBED_DIM + 2, NUM_CLASSES)),
        'head2_b': jnp.zeros((NUM_CLASSES,), jnp.float32),
        'levels': [],
    }
    seq = PATCH_SIZES[0] * PATCH_SIZES[1] * PATCH_SIZES[2]
    for heads, depth in zip(LAYER_HEADS, DEPTHS):
        inner = heads * DIM_HEAD
        layers = []
        for _ in range(depth):
            layers.append(dict(
                heads=heads, dim_head=DIM_HEAD,
                ln1_g=jnp.ones((EMBED_DIM,), jnp.float32),
                ln1_b=jnp.zeros((EMBED_DIM,), jnp.float32),
                w_qkv=nrm((EMBED_DIM, 3 * inner)),
                b_qkv=jnp.zeros((3 * inner,), jnp.float32),
                w_o=nrm((inner, EMBED_DIM)),
                b_o=jnp.zeros((EMBED_DIM,), jnp.float32),
                ln2_g=jnp.ones((EMBED_DIM,), jnp.float32),
                ln2_b=jnp.zeros((EMBED_DIM,), jnp.float32),
                w_ff1=nrm((EMBED_DIM, EMBED_DIM * MLP_MULT)),
                b_ff1=jnp.zeros((EMBED_DIM * MLP_MULT,), jnp.float32),
                w_ff2=nrm((EMBED_DIM * MLP_MULT, EMBED_DIM)),
                b_ff2=jnp.zeros((EMBED_DIM,), jnp.float32),
            ))
        params['levels'].append(dict(
            transformer=dict(pos_emb=nrm((seq, EMBED_DIM)), layers=layers),
            conv=dict(
                conv_w=nrm((EMBED_DIM, EMBED_DIM, 3, 3, 3)),
                conv_b=jnp.zeros((EMBED_DIM,), jnp.float32),
                cn_g=jnp.ones((EMBED_DIM,), jnp.float32),
                cn_b=jnp.zeros((EMBED_DIM,), jnp.float32),
            ),
        ))
    return params


if __name__ == "__main__":
    key = jax.random.PRNGKey(0)
    kp, kx, kx2 = jax.random.split(key, 3)
    params = init_params(kp)
    x = jax.random.normal(kx, (BATCH, CHANNELS) + IMAGE_SIZES, dtype=jnp.float32)
    x2 = jax.random.normal(kx2, (BATCH, 2), dtype=jnp.float32)

    out = nest2_forward(params, x, x2)
    out = jax.block_until_ready(out)
    assert out.shape == (BATCH, NUM_CLASSES), out.shape
    print("KERNEL_OK")
</pallas_src>

<mosaic_0001>
module attributes {stable_mosaic.version = 11 : i64} {
  func.func @_fused_mm_kernel(%arg0: i32, %arg1: memref<64x64xf32, #tpu.memory_space<vmem>>, %arg2: memref<64x32xf32, #tpu.memory_space<vmem>>, %arg3: memref<1x32xf32, #tpu.memory_space<vmem>>, %arg4: memref<64x32xbf16, #tpu.memory_space<vmem>>) attributes {dimension_semantics = [#tpu.dimension_semantics<parallel>], iteration_bounds = array<i64: 2>, scalar_prefetch = 0 : i64, scratch_operands = 0 : i64, tpu.core_type = #tpu.core_type<tc>, window_params = [{transform_indices = @transform_0, window_bounds = array<i64: 64, 64>}, {pipeline_mode = #tpu.pipeline_mode<synchronous>, transform_indices = @transform_1, window_bounds = array<i64: 64, 32>}, {pipeline_mode = #tpu.pipeline_mode<synchronous>, transform_indices = @transform_2, window_bounds = array<i64: 1, 32>}, {transform_indices = @transform_3, window_bounds = array<i64: 64, 32>}]} {
    %c0 = arith.constant 0 : index
    %c0_0 = arith.constant 0 : index
    %0 = vector.load %arg1[%c0, %c0_0] : memref<64x64xf32, #tpu.memory_space<vmem>>, vector<64x64xf32>
    %1 = arith.truncf %0 : vector<64x64xf32> to vector<64x64xbf16>
    %c0_1 = arith.constant 0 : index
    %c0_2 = arith.constant 0 : index
    %2 = vector.load %arg2[%c0_1, %c0_2] : memref<64x32xf32, #tpu.memory_space<vmem>>, vector<64x32xf32>
    %3 = arith.truncf %2 : vector<64x32xf32> to vector<64x32xbf16>
    %cst = arith.constant dense<0.000000e+00> : vector<64x32xf32>
    %4 = tpu.matmul %1, %3, %cst {dimension_numbers = #tpu.dot_dimension_numbers<[1], [0], [0], [1], [0, 0, 1, 1], [], []>} : vector<64x64xbf16>, vector<64x32xbf16>, vector<64x32xf32> -> vector<64x32xf32>
    %c0_3 = arith.constant 0 : index
    %c0_4 = arith.constant 0 : index
    %5 = vector.load %arg3[%c0_3, %c0_4] : memref<1x32xf32, #tpu.memory_space<vmem>>, vector<1x32xf32>
    %6 = vector.broadcast %5 : vector<1x32xf32> to vector<64x32xf32>
    %7 = arith.addf %4, %6 : vector<64x32xf32>
    %8 = arith.truncf %7 : vector<64x32xf32> to vector<64x32xbf16>
    %c0_5 = arith.constant 0 : index
    %c0_6 = arith.constant 0 : index
    %9 = vector.load %arg4[%c0_5, %c0_6] : memref<64x32xbf16, #tpu.memory_space<vmem>>, vector<64x32xbf16>
    tpu.vector_store %arg4[%c0_5, %c0_6], %8 {strides = array<i32>} : memref<64x32xbf16, #tpu.memory_space<vmem>>, vector<64x32xbf16>,
    return
  }
  func.func @transform_0(%arg0: i32) -> (i32, i32) {
    %c0_i32 = arith.constant 0 : i32
    %c0_i32_0 = arith.constant 0 : i32
    return %arg0, %c0_i32 : i32, i32
  }
  func.func @transform_1(%arg0: i32) -> (i32, i32) {
    %c0_i32 = arith.constant 0 : i32
    %c0_i32_0 = arith.constant 0 : i32
    %c0_i32_1 = arith.constant 0 : i32
    return %c0_i32, %c0_i32_0 : i32, i32
  }
  func.func @transform_2(%arg0: i32) -> (i32, i32) {
    %c0_i32 = arith.constant 0 : i32
    %c0_i32_0 = arith.constant 0 : i32
    %c0_i32_1 = arith.constant 0 : i32
    return %c0_i32, %c0_i32_0 : i32, i32
  }
  func.func @transform_3(%arg0: i32) -> (i32, i32) {
    %c0_i32 = arith.constant 0 : i32
    %c0_i32_0 = arith.constant 0 : i32
    return %arg0, %c0_i32 : i32, i32
  }
}

</mosaic_0001>

<llo_original>
// kernel: tpu_custom_call.1
$region0: #{tpu_custom_call.1}
  #allocation0 [shape = 'u32[]', space=smem, size = 0x4, offset = 0x4, fixed_abs, tag = 'smem constant byte address 0x4 - core index']
  #allocation1 [shape = 'u32[144,128]{1,0:T(1,128)}', space=vmem, size = 0x12000, scoped, tag = 'internal scratch']
  %s0 = inlined_call_operand.vmem [shape: f32[128,64], index: 0, kind: input, shape index: {}]
  %s1 = inlined_call_operand.vmem [shape: f32[64,32], index: 1, kind: input, shape index: {}]
  %s2 = inlined_call_operand.vmem [shape: f32[1,32], index: 2, kind: input, shape index: {}]
  %s3 = inlined_call_operand.vmem [shape: bf16[128,32], index: 3, kind: output, shape index: {}]
  %s4 = sld [smem:[#allocation0]]
  $region45: #{tpu_custom_call.1} parent=0
    _
  %s6 = ssub.s32 1, %s4
  %s7 = scalar_select 0, %s6, %s4
  loop: start=0, step=1, limit=4
  $region2: #{tpu_custom_call.1} parent=0 // loop_pre_header
    _
  $region3: #{tpu_custom_call.1} parent=0 // loop_header
    %s9 = sphi 0, %s13
    %p10 = scmp.ge.s32.totalorder %s9, 4
    %s19 = sphi 0, %s21
    %s22 = sphi 0, %s19
    %s23 = sphi 0, %s22
    %s39 = sphi 0, %s23
    %s43 = sphi 0, %s43
    %s45 = sphi 0, %s43
    %s46 = sphi 0, %s45
    %s60 = sphi 0, %s46
    %s64 = sphi 0, %s64
    %s66 = sphi 0, %s64
    %s67 = sphi 0, %s66
    %s81 = sphi 0, %s67
    %s87 = sphi 0, %s89
    %s90 = sphi 0, %s87
    %s91 = sphi 0, %s90
    %s107 = sphi 0, %s91
  $region4: #{tpu_custom_call.1} parent=0 // loop_header_branch
    %12 = sbr.rel (%p10) target = $region8
  $region5: #{tpu_custom_call.1} parent=0 // loop_body
    %s14 = ssub.s32 %s9, 1
    %s15 = ssub.s32 %s9, 2
    %s16 = sadd.s32 %s9, 1
    %s17 = ssub.s32 %s9, %s16
    %p18 = scmp.eq.s32.totalorder %s17, 0
    %s20 = sadd.s32 %s19, 1
    %s21 = scalar_select %p18, %s19, %s20
    %p24 = pneg %p18
    %p25 = scmp.eq.s32.totalorder %s9, 1
    %p26 = por %p24, %p25
    %p27 = scmp.ne.s32.totalorder %s19, %s22
    %p28 = scmp.eq.s32.totalorder %s9, 0
    %p29 = por %p27, %p28
    %p30 = scmp.ne.s32.totalorder %s19, %s22
    %p31 = scmp.eq.s32.totalorder %s14, 1
    %p32 = por %p30, %p31
    %p33 = scmp.ne.s32.totalorder %s22, %s23
    %p34 = scmp.eq.s32.totalorder %s14, 0
    %p35 = por %p33, %p34
    %p36 = scmp.ne.s32.totalorder %s22, %s23
    %p37 = scmp.eq.s32.totalorder %s15, 1
    %p38 = por %p36, %p37
    %p40 = scmp.ne.s32.totalorder %s23, %s39
    %p41 = scmp.eq.s32.totalorder %s15, 0
    %p42 = por %p40, %p41
    %s44 = sadd.s32 %s43, 1
    %p47 = scmp.eq.s32.totalorder %s9, 1
    %p48 = scmp.ne.s32.totalorder %s43, %s45
    %p49 = scmp.eq.s32.totalorder %s9, 0
    %p50 = por %p48, %p49
    %p51 = scmp.ne.s32.totalorder %s43, %s45
    %p52 = scmp.eq.s32.totalorder %s14, 1
    %p53 = por %p51, %p52
    %p54 = scmp.ne.s32.totalorder %s45, %s46
    %p55 = scmp.eq.s32.totalorder %s14, 0
    %p56 = por %p54, %p55
    %p57 = scmp.ne.s32.totalorder %s45, %s46
    %p58 = scmp.eq.s32.totalorder %s15, 1
    %p59 = por %p57, %p58
    %p61 = scmp.ne.s32.totalorder %s46, %s60
    %p62 = scmp.eq.s32.totalorder %s15, 0
    %p63 = por %p61, %p62
    %s65 = sadd.s32 %s64, 1
    %p68 = scmp.eq.s32.totalorder %s9, 1
    %p69 = scmp.ne.s32.totalorder %s64, %s66
    %p70 = scmp.eq.s32.totalorder %s9, 0
    %p71 = por %p69, %p70
    %p72 = scmp.ne.s32.totalorder %s64, %s66
    %p73 = scmp.eq.s32.totalorder %s14, 1
    %p74 = por %p72, %p73
    %p75 = scmp.ne.s32.totalorder %s66, %s67
    %p76 = scmp.eq.s32.totalorder %s14, 0
    %p77 = por %p75, %p76
    %p78 = scmp.ne.s32.totalorder %s66, %s67
    %p79 = scmp.eq.s32.totalorder %s15, 1
    %p80 = por %p78, %p79
    %p82 = scmp.ne.s32.totalorder %s67, %s81
    %p83 = scmp.eq.s32.totalorder %s15, 0
    %p84 = por %p82, %p83
    %s85 = ssub.s32 %s9, %s16
    %p86 = scmp.eq.s32.totalorder %s85, 0
    %s88 = sadd.s32 %s87, 1
    %s89 = scalar_select %p86, %s87, %s88
    %p92 = pneg %p86
    %p93 = scmp.eq.s32.totalorder %s9, 1
    %p94 = por %p92, %p93
    %p95 = scmp.ne.s32.totalorder %s87, %s90
    %p96 = scmp.eq.s32.totalorder %s9, 0
    %p97 = por %p95, %p96
    %p98 = scmp.ne.s32.totalorder %s87, %s90
    %p99 = scmp.eq.s32.totalorder %s14, 1
    %p100 = por %p98, %p99
    %p101 = scmp.ne.s32.totalorder %s90, %s91
    %p102 = scmp.eq.s32.totalorder %s14, 0
    %p103 = por %p101, %p102
    %p104 = scmp.ne.s32.totalorder %s90, %s91
    %p105 = scmp.eq.s32.totalorder %s15, 1
    %p106 = por %p104, %p105
    %p108 = scmp.ne.s32.totalorder %s91, %s107
    %p109 = scmp.eq.s32.totalorder %s15, 0
    %p110 = por %p108, %p109
    %p111 = scmp.le.s32.totalorder 1, %s9
    %p112 = scmp.lt.s32.totalorder %s9, 3
    %p113 = pnand %p111, %p112
    %p114 = pneg %p113
    // Predicated region
    $region9: #{tpu_custom_call.1} parent=5 // pred_check
      _
    $region10: #{tpu_custom_call.1} parent=5 // pred_check_branch
      %116 = sbr.rel (%p113) target = $region12
    $region11: #{tpu_custom_call.1} parent=5 // pred_region
      %s117 = ssub.s32 %s9, 1
      // Predicated region
      $region13: #{tpu_custom_call.1} parent=11 // pred_check
        %p118 = pneg %p56
      $region14: #{tpu_custom_call.1} parent=11 // pred_check_branch
        %120 = sbr.rel (%p118) target = $region16
      $region15: #{tpu_custom_call.1} parent=11 // pred_region
        _
      $region16: #{tpu_custom_call.1} parent=11 // pred_fallthru
        _
      // Predicated region
      $region17: #{tpu_custom_call.1} parent=11 // pred_check
        %p121 = pneg %p77
      $region18: #{tpu_custom_call.1} parent=11 // pred_check_branch
        %123 = sbr.rel (%p121) target = $region20
      $region19: #{tpu_custom_call.1} parent=11 // pred_region
        _
      $region20: #{tpu_custom_call.1} parent=11 // pred_fallthru
        _
    $region12: #{tpu_custom_call.1} parent=5 // pred_fallthru
      _
    %p124 = scmp.lt.s32.totalorder %s9, 2
    // Predicated region
    $region21: #{tpu_custom_call.1} parent=5 // pred_check
      %p125 = pneg %p124
    $region22: #{tpu_custom_call.1} parent=5 // pred_check_branch
      %127 = sbr.rel (%p125) target = $region24
    $region23: #{tpu_custom_call.1} parent=5 // pred_region
      // Predicated region
      $region25: #{tpu_custom_call.1} parent=23 // pred_check
        %p128 = pneg %p29
      $region26: #{tpu_custom_call.1} parent=23 // pred_check_branch
        %130 = sbr.rel (%p128) target = $region28
      $region27: #{tpu_custom_call.1} parent=23 // pred_region
        %s131 = smul.u32 8, %s9
        %p132 = scmp.lt.s32.totalorder %s131, 15
        %s133 = scalar_select %p132, %s131, 15
        %s134 = smul.addr %s133, 8
        %s135 = scalar_lea.vmem %s0, %s134
        %s136 = smul.u32 8, %s9
      $region28: #{tpu_custom_call.1} parent=23 // pred_fallthru
        _
    $region24: #{tpu_custom_call.1} parent=5 // pred_fallthru
      _
    %p137 = scmp.le.s32.totalorder 1, %s9
    %p138 = scmp.lt.s32.totalorder %s9, 3
    %p139 = pnand %p137, %p138
    %p140 = pneg %p139
    // Predicated region
    $region29: #{tpu_custom_call.1} parent=5 // pred_check
      _
    $region30: #{tpu_custom_call.1} parent=5 // pred_check_branch
      %142 = sbr.rel (%p139) target = $region32
    $region31: #{tpu_custom_call.1} parent=5 // pred_region
      %s143 = ssub.s32 %s9, 1
      %s144 = smul.u32 8, %s14
      %p145 = scmp.lt.s32.totalorder %s144, 15
      %s146 = scalar_select %p145, %s144, 15
      %s147 = smul.addr %s146, 8
      %s148 = scalar_lea.vmem %s0, %s147
      %p149 = pneg %p35
      %p150 = pneg %p32
      %p151 = pneg %p56
      %p152 = pneg %p53
      %p153 = pneg %p77
      %p154 = pneg %p74
      %p155 = pneg %p103
      %p156 = pneg %p100
      %s157 = smul.u32 8, %s14
      %p158 = scmp.lt.s32.totalorder %s157, 15
      %s159 = scalar_select %p158, %s157, 15
      %s160 = smul.addr %s159, 4
      %s161 = scalar_lea.vmem %s3, %s160
      %s162 = smul.u32 8, %s14
      %p163 = scmp.lt.s32.totalorder %s162, 15
      %s164 = scalar_select %p163, %s162, 15
      %s165 = smul.addr %s164, 8
      %s166 = scalar_lea.vmem %s0, %s165
      %s167 = smul.u32 8, %s14
      %s168 = smul.u32 8, %s14
      %p169 = scmp.lt.s32.totalorder %s168, 15
      %s170 = scalar_select %p169, %s168, 15
      %s171 = smul.addr %s170, 4
      %s172 = scalar_lea.vmem %s3, %s171
      %s173 = smul.u32 8, %s14
      %v175 = vld [vmem:[%s166] sm:$0xff]
      %v176 = vld [vmem:[%s166 + $0x8] sm:$0xff]
      %v177 = vld [vmem:[%s166 + $0x10] sm:$0xff]
      %v178 = vld [vmem:[%s166 + $0x18] sm:$0xff]
      %v179 = vld [vmem:[%s166 + $0x20] sm:$0xff]
      %v180 = vld [vmem:[%s166 + $0x28] sm:$0xff]
      %v181 = vld [vmem:[%s166 + $0x30] sm:$0xff]
      %v182 = vld [vmem:[%s166 + $0x38] sm:$0xff]
      %v183 = vpack.c.bf16 %v176, %v175
      %v184 = vpack.c.bf16 %v178, %v177
      %v185 = vpack.c.bf16 %v180, %v179
      %v186 = vpack.c.bf16 %v182, %v181
      %v187 = vld [vmem:[%s1] sm:$0xff]
      %v188 = vld [vmem:[%s1 + $0x8] sm:$0xff]
      %v189 = vld [vmem:[%s1 + $0x10] sm:$0xff]
      %v190 = vld [vmem:[%s1 + $0x18] sm:$0xff]
      %v191 = vld [vmem:[%s1 + $0x20] sm:$0xff]
      %v192 = vld [vmem:[%s1 + $0x28] sm:$0xff]
      %v193 = vld [vmem:[%s1 + $0x30] sm:$0xff]
      %v194 = vld [vmem:[%s1 + $0x38] sm:$0xff]
      %v195 = vpack.c.bf16 %v188, %v187
      %v196 = vpack.c.bf16 %v190, %v189
      %v197 = vpack.c.bf16 %v192, %v191
      %v198 = vpack.c.bf16 %v194, %v193
      %v199 = vld [vmem:[%s2] sm:$0x1]
      %v201 = vlaneseq
      %v202 = vshrl.u32 %v201, 7
      %v203 = vsub.s32 0, %v202
      %v204 = vrot.slane %v199, %v203
      %vm206 = vcmask 523264
      %v208 = vsel %vm206, %v183, 0
      %v211 = vsel %vm206, %v184, 0
      %v214 = vsel %vm206, %v185, 0
      %v217 = vsel %vm206, %v186, 0
      %219 = vmatprep.subr.bf16.mxu0 0
      %220 = vmatpush1.bf16.msra.mxu0 %v195
      %221 = vmatprep.subr.bf16.mxu0 0
      %222 = vmatpush1.bf16.msra.mxu0 %v196
      %223 = vmatprep.subr.bf16.mxu0 0
      %224 = vmatpush1.bf16.msra.mxu0 %v197
      %225 = vmatprep.subr.bf16.mxu0 0
      %226 = vmatpush1.bf16.msra.mxu0 %v198
      %227 = vmatprep.subr.bf16.mxu0 0
      %228 = vmatpush1.bf16.msra.mxu0 0
      %229 = vmatprep.subr.bf16.mxu0 0
      %230 = vmatpush1.bf16.msra.mxu0 0
      %231 = vmatprep.subr.bf16.mxu0 0
      %232 = vmatpush1.bf16.msra.mxu0 0
      %233 = vmatprep.subr.bf16.mxu0 0
      %234 = vmatpush1.bf16.msra.mxu0 0
      %235 = vmatprep.subr.bf16.mxu0 0
      %236 = vmatpush1.bf16.msra.mxu0 0
      %237 = vmatprep.subr.bf16.mxu0 0
      %238 = vmatpush1.bf16.msra.mxu0 0
      %239 = vmatprep.subr.bf16.mxu0 0
      %240 = vmatpush1.bf16.msra.mxu0 0
      %241 = vmatprep.subr.bf16.mxu0 0
      %242 = vmatpush1.bf16.msra.mxu0 0
      %243 = vmatprep.subr.bf16.mxu0 0
      %244 = vmatpush1.bf16.msra.mxu0 0
      %245 = vmatprep.subr.bf16.mxu0 0
      %246 = vmatpush1.bf16.msra.mxu0 0
      %247 = vmatprep.subr.bf16.mxu0 0
      %248 = vmatpush1.bf16.msra.mxu0 0
      %249 = vmatprep.subr.bf16.mxu0 0
      %250 = vmatpush1.bf16.msra.mxu0 0
      %251 = vmatprep.mubr.bf16.mxu0 0
      %252 = vmatmul.mubr.bf16.gmra.mrb[0].mxu0 %v208
      %v253 = vpop.f32.mrb[0].mxu0
      %v254 = vadd.f32 %v204, %v253
      %v255 = vpop.f32.mrb[0].mxu0
      %v256 = vpop.f32.mrb[0].mxu0
      %v257 = vadd.f32 %v204, %v256
      %v258 = vpop.f32.mrb[0].mxu0
      %259 = vmatprep.mubr.bf16.mxu0 0
      %260 = vmatmul.mubr.bf16.gmra.mrb[0].mxu0 %v211
      %v261 = vpop.f32.mrb[0].mxu0
      %v262 = vadd.f32 %v204, %v261
      %v263 = vpop.f32.mrb[0].mxu0
      %v264 = vpop.f32.mrb[0].mxu0
      %v265 = vadd.f32 %v204, %v264
      %v266 = vpop.f32.mrb[0].mxu0
      %267 = vmatprep.mubr.bf16.mxu0 0
      %268 = vmatmul.mubr.bf16.gmra.mrb[0].mxu0 %v214
      %v269 = vpop.f32.mrb[0].mxu0
      %v270 = vadd.f32 %v204, %v269
      %v271 = vpop.f32.mrb[0].mxu0
      %v272 = vpop.f32.mrb[0].mxu0
      %v273 = vadd.f32 %v204, %v272
      %v274 = vpop.f32.mrb[0].mxu0
      %275 = vmatprep.mubr.bf16.mxu0 0
      %276 = vmatmul.mubr.bf16.gmra.mrb[0].mxu0 %v217
      %v277 = vpop.f32.mrb[0].mxu0
      %v278 = vadd.f32 %v204, %v277
      %v279 = vpop.f32.mrb[0].mxu0
      %v280 = vpop.f32.mrb[0].mxu0
      %v281 = vadd.f32 %v204, %v280
      %v282 = vpop.f32.mrb[0].mxu0
      %283 = vdwg.mxu0
      %v284 = vpack.c.bf16 %v257, %v254
      %v285 = vpack.c.bf16 %v265, %v262
      %v286 = vpack.c.bf16 %v273, %v270
      %v287 = vpack.c.bf16 %v281, %v278
      %v292 = vunpack.c.l.b16 %v284
      %v293 = vunpack.c.h.b16 %v284
      %v294 = vunpack.c.l.b16 %v285
      %v295 = vunpack.c.h.b16 %v285
      %v296 = vunpack.c.l.b16 %v286
      %v297 = vunpack.c.h.b16 %v286
      %v298 = vunpack.c.l.b16 %v287
      %v299 = vunpack.c.h.b16 %v287
      %v300 = vpack.c.b16 %v292, %v292
      %v301 = vpack.c.b16 %v293, %v293
      %v302 = vpack.c.b16 %v294, %v294
      %v303 = vpack.c.b16 %v295, %v295
      %v304 = vpack.c.b16 %v296, %v296
      %v305 = vpack.c.b16 %v297, %v297
      %v306 = vpack.c.b16 %v298, %v298
      %v307 = vpack.c.b16 %v299, %v299
      %vm316 = vcmask 257024
      %317 = vst.msk [vmem:[%s172] sm:$0xf] %vm316, %v300
      %318 = vst.msk [vmem:[%s172 + $0x4] sm:$0xf] %vm316, %v301
      %319 = vst.msk [vmem:[%s172 + $0x8] sm:$0xf] %vm316, %v302
      %320 = vst.msk [vmem:[%s172 + $0xc] sm:$0xf] %vm316, %v303
      %321 = vst.msk [vmem:[%s172 + $0x10] sm:$0xf] %vm316, %v304
      %322 = vst.msk [vmem:[%s172 + $0x14] sm:$0xf] %vm316, %v305
      %323 = vst.msk [vmem:[%s172 + $0x18] sm:$0xf] %vm316, %v306
      %324 = vst.msk [vmem:[%s172 + $0x1c] sm:$0xf] %vm316, %v307
      %s325 = smul.u32 8, %s14
      %p326 = scmp.lt.s32.totalorder %s325, 15
      %s327 = scalar_select %p326, %s325, 15
      %s328 = smul.addr %s327, 4
      %s329 = scalar_lea.vmem %s3, %s328
      // Predicated region
      $region33: #{tpu_custom_call.1} parent=31 // pred_check
        %p330 = pneg %p100
      $region34: #{tpu_custom_call.1} parent=31 // pred_check_branch
        %332 = sbr.rel (%p330) target = $region36
      $region35: #{tpu_custom_call.1} parent=31 // pred_region
        %s333 = smul.u32 8, %s14
      $region36: #{tpu_custom_call.1} parent=31 // pred_fallthru
        _
    $region32: #{tpu_custom_call.1} parent=5 // pred_fallthru
      _
    %p334 = scmp.le.s32.totalorder 2, %s9
    // Predicated region
    $region37: #{tpu_custom_call.1} parent=5 // pred_check
      %p335 = pneg %p334
    $region38: #{tpu_custom_call.1} parent=5 // pred_check_branch
      %337 = sbr.rel (%p335) target = $region40
    $region39: #{tpu_custom_call.1} parent=5 // pred_region
      %s338 = ssub.s32 %s9, 2
      // Predicated region
      $region41: #{tpu_custom_call.1} parent=39 // pred_check
        %p339 = pneg %p106
      $region42: #{tpu_custom_call.1} parent=39 // pred_check_branch
        %341 = sbr.rel (%p339) target = $region44
      $region43: #{tpu_custom_call.1} parent=39 // pred_region
        %s342 = smul.u32 8, %s15
        %p343 = scmp.lt.s32.totalorder %s342, 15
        %s344 = scalar_select %p343, %s342, 15
        %s345 = smul.addr %s344, 4
        %s346 = scalar_lea.vmem %s3, %s345
      $region44: #{tpu_custom_call.1} parent=39 // pred_fallthru
        _
    $region40: #{tpu_custom_call.1} parent=5 // pred_fallthru
      _
  $region6: #{tpu_custom_call.1} parent=0 // loop_footer
    %s13 = sadd.s32 1, %s9
  $region7: #{tpu_custom_call.1} parent=0 // loop_footer_branch
    %8 = sbr.rel target = $region3
  $region8: #{tpu_custom_call.1} parent=0 // loop_exit
    _

</llo_original>
